<compile_context>
chip_gen: v6e
topology: v6e:2x2x1
jax: 0.10.0
libtpu: 0.0.40
codegen_flags: <defaults>
</compile_context>

<pallas_src>
import functools

import numpy as np
import jax
import jax.numpy as jnp
from jax import lax
from jax.experimental import pallas as pl
from jax.experimental.pallas import tpu as pltpu

BN_EPS = 1e-5
LANE = 128


def _round_up(x, m):
    return (x + m - 1) // m * m


def _vmem_limit_bytes():
    """Generation-scaled VMEM budget: ~3/4 of capacity, always leaving headroom."""
    try:
        cap = int(pltpu.get_tpu_info().vmem_capacity_bytes)
    except Exception:
        cap = 64 << 20                      # conservative (v7x-sized) fallback
    return int(min(cap * 3 // 4, cap - (16 << 20)))


def _gemm_stats_kernel(p_ref, w_ref, y_ref, sum_ref, sq_ref, *, TM, M):
    """One row tile: (TM,Cp)bf16 @ (Cp,Cpo)bf16 -> f32 acc; bf16 y + f32 BN partials."""
    acc = jnp.dot(p_ref[...], w_ref[...], preferred_element_type=jnp.float32)
    y_ref[...] = acc.astype(y_ref.dtype)

    cpo = acc.shape[-1]

    def write_stats(a):
        s1 = jnp.sum(a, axis=0)             # (Cpo,)  sum(x)     (mask folded into `a`)
        s2 = jnp.sum(a * acc, axis=0)       # (Cpo,)  sum(x^2)   (mask applied once)
        sum_ref[...] = jnp.broadcast_to(s1, (1, 8, cpo))
        sq_ref[...] = jnp.broadcast_to(s2, (1, 8, cpo))

    if M % TM != 0:
        # Only the ragged tail tile pays for the iota + mask multiplies.
        i = pl.program_id(0)
        last = pl.num_programs(0) - 1

        @pl.when(i == last)
        def _():
            rid = lax.broadcasted_iota(jnp.int32, (TM, 1), 0)
            mask = (rid < (M - i * TM)).astype(jnp.float32)
            write_stats(acc * mask)

        @pl.when(i != last)
        def _():
            write_stats(acc)
    else:
        write_stats(acc)


def _bn_act_kernel(y_ref, scale_ref, shift_ref, o_ref, *, act):
    """Per-channel affine (folded BatchNorm) + activation on one tile."""
    z = y_ref[...].astype(jnp.float32) * scale_ref[...] + shift_ref[...]
    if act == "silu":
        z = z * jax.nn.sigmoid(z)
    elif act == "relu":
        z = jnp.maximum(z, 0.0)
    elif act == "lrelu":
        z = jnp.where(z >= 0, z, 0.1 * z)
    else:
        raise ValueError(f"unsupported act: {act}")
    o_ref[...] = z


def baseconv_forward(x_nchw, params, *, ksize, stride, act="silu",
                     tile_m=None, eps=BN_EPS):
    """BaseConv.forward: Conv2d(K, stride, pad=(K-1)//2, groups=1, bias=False)
    -> BatchNorm2d (training-mode batch statistics) -> activation.

    x_nchw: (B, Cin, H, W) float32 -> (B, Cout, Ho, Wo) float32.
    """
    B, Cin, H, W = x_nchw.shape
    K, s = int(ksize), int(stride)
    assert K >= 1 and s >= 1
    assert params["w"].shape[:3] == (K, K, Cin)
    Cout = params["w"].shape[-1]

    pad = (K - 1) // 2
    Ho = (H + 2 * pad - K) // s + 1
    Wo = (W + 2 * pad - K) // s + 1
    M = B * Ho * Wo                       # GEMM rows (all output pixels)
    Cfold = K * K * Cin                   # taps folded into the contraction dim
    Cp = _round_up(Cfold, LANE)
    Cpo = _round_up(Cout, LANE)

    vmem_limit = _vmem_limit_bytes()

    # ---- row-tile height TM (VMEM-budget driven; multiple of 8) --------------
    if tile_m is None:
        w_bytes = Cp * Cpo * 2
        per_row = 2 * (Cp * 2) + 2 * (Cpo * 2) + Cpo * 4   # dbl-buf in/out + f32 acc
        tile_m = max(8, (vmem_limit // 2 - w_bytes) // per_row)
    TM = int(min(int(tile_m), 4096, _round_up(M, 8)))
    TM = max(8, (TM // 8) * 8)
    n_tiles = -(-M // TM)
    M_pad = n_tiles * TM

    # ---- wrapper-side layout: NCHW -> NHWC (bf16), pad, fold taps (im2col) ---
    x = jnp.transpose(x_nchw, (0, 2, 3, 1)).astype(jnp.bfloat16)
    x = jnp.pad(x, ((0, 0), (pad, pad), (pad, pad), (0, 0)))
    cols = [x[:, kh:kh + (Ho - 1) * s + 1:s, kw:kw + (Wo - 1) * s + 1:s, :]
            for kh in range(K) for kw in range(K)]
    p = jnp.concatenate(cols, axis=-1) if len(cols) > 1 else cols[0]
    p = p.reshape(M, Cfold)
    p = jnp.pad(p, ((0, M_pad - M), (0, Cp - Cfold)))          # bf16, lane-dense

    w = jnp.pad(params["w"].astype(jnp.float32).reshape(Cfold, Cout),
                ((0, Cp - Cfold), (0, Cpo - Cout))).astype(jnp.bfloat16)
    gamma = jnp.pad(params["gamma"].astype(jnp.float32), (0, Cpo - Cout),
                    constant_values=1.0)
    beta = jnp.pad(params["beta"].astype(jnp.float32), (0, Cpo - Cout))

    # ---- pass 1: GEMM tiles + per-tile BN partials ----------------------------
    y, tsum, tsq = pl.pallas_call(
        functools.partial(_gemm_stats_kernel, TM=TM, M=M),
        grid=(n_tiles,),
        in_specs=[
            pl.BlockSpec((TM, Cp), lambda i: (i, 0)),
            # NOTE: weight block index is constant; on v7x pipeline_mode=pl.Buffered(1)
            # would single-buffer it and save ~Cp*Cpo*2 bytes of VMEM.
            pl.BlockSpec((Cp, Cpo), lambda i: (0, 0)),
        ],
        out_specs=(
            pl.BlockSpec((TM, Cpo), lambda i: (i, 0)),
            pl.BlockSpec((1, 8, Cpo), lambda i: (i, 0, 0)),
            pl.BlockSpec((1, 8, Cpo), lambda i: (i, 0, 0)),
        ),
        out_shape=(
            jax.ShapeDtypeStruct((M_pad, Cpo), jnp.bfloat16),   # conv out, pre-BN
            jax.ShapeDtypeStruct((n_tiles, 8, Cpo), jnp.float32),
            jax.ShapeDtypeStruct((n_tiles, 8, Cpo), jnp.float32),
        ),
        compiler_params=pltpu.CompilerParams(
            dimension_semantics=("parallel",),
            vmem_limit_bytes=vmem_limit),
    )(p, w)

    # ---- tiny combine: biased batch stats -> folded BN scale/shift ------------
    # TODO(synk): one-pass E[x^2]-E[x]^2 in f32 can cancel if |mean| >> std; a
    # compensated / per-tile-centered sum would be more robust for huge B*Ho*Wo.
    cnt = float(M)
    mean = jnp.sum(tsum[:, 0, :], axis=0) / cnt
    var = jnp.maximum(jnp.sum(tsq[:, 0, :], axis=0) / cnt - mean * mean, 0.0)
    inv = lax.rsqrt(var + eps)
    scale = (gamma * inv).reshape(1, Cpo)
    shift = (beta - mean * gamma * inv).reshape(1, Cpo)

    # ---- pass 2: normalize + activation ---------------------------------------
    out = pl.pallas_call(
        functools.partial(_bn_act_kernel, act=act),
        grid=(n_tiles,),
        in_specs=[
            pl.BlockSpec((TM, Cpo), lambda i: (i, 0)),
            pl.BlockSpec((1, Cpo), lambda i: (0, 0)),
            pl.BlockSpec((1, Cpo), lambda i: (0, 0)),
        ],
        out_specs=pl.BlockSpec((TM, Cpo), lambda i: (i, 0)),
        out_shape=jax.ShapeDtypeStruct((M_pad, Cpo), jnp.float32),
        compiler_params=pltpu.CompilerParams(
            dimension_semantics=("parallel",),
            vmem_limit_bytes=vmem_limit),
    )(y, scale, shift)

    out = out[:M, :Cout].reshape(B, Ho, Wo, Cout)
    return jnp.transpose(out, (0, 3, 1, 2))                    # back to NCHW


def _ref_forward(x_nchw, params, *, ksize, stride, act="silu", eps=BN_EPS):
    """Pure-JAX reference (matches PyTorch BaseConv.forward in train mode)."""
    pad = (ksize - 1) // 2
    x = jnp.transpose(x_nchw, (0, 2, 3, 1))
    y = lax.conv_general_dilated(
        x, params["w"], window_strides=(stride, stride),
        padding=[(pad, pad), (pad, pad)],
        dimension_numbers=("NHWC", "HWIO", "NHWC"))
    mu = jnp.mean(y, axis=(0, 1, 2), keepdims=True)
    var = jnp.mean((y - mu) ** 2, axis=(0, 1, 2), keepdims=True)
    z = (y - mu) * lax.rsqrt(var + eps) * params["gamma"] + params["beta"]
    if act == "silu":
        z = z * jax.nn.sigmoid(z)
    elif act == "relu":
        z = jnp.maximum(z, 0.0)
    elif act == "lrelu":
        z = jnp.where(z >= 0, z, 0.1 * z)
    return jnp.transpose(z, (0, 3, 1, 2))


def init_params(key, in_channels, out_channels, ksize):
    kw, kg, kb = jax.random.split(key, 3)
    fan_in = in_channels * ksize * ksize
    return {
        # torch Conv2d weight (Cout, Cin, K, K) stored here as HWIO (K, K, Cin, Cout)
        "w": jax.random.normal(kw, (ksize, ksize, in_channels, out_channels),
                               jnp.float32) / np.sqrt(fan_in),
        "gamma": 1.0 + 0.1 * jax.random.normal(kg, (out_channels,), jnp.float32),
        "beta": 0.1 * jax.random.normal(kb, (out_channels,), jnp.float32),
    }


if __name__ == "__main__":
    key = jax.random.PRNGKey(0)
    k_x, k_p = jax.random.split(key)

    B, Cin, Cout, H, W = 2, 4, 8, 16, 16
    x = jax.random.normal(k_x, (B, Cin, H, W), jnp.float32)

    # (ksize, stride, tile_m): default single-tile path, multi-tile path with a
    # ragged tail (exercises stats masking), and a strided conv.
    configs = [(3, 1, None), (3, 1, 120), (3, 2, None)]
    for ksize, stride, tile_m in configs:
        params = init_params(k_p, Cin, Cout, ksize)
        ref = _ref_forward(x, params, ksize=ksize, stride=stride)
        out = jax.block_until_ready(
            baseconv_forward(x, params, ksize=ksize, stride=stride, tile_m=tile_m))
        # bf16 MXU operands -> looser tolerance than a pure-f32 comparison.
        np.testing.assert_allclose(np.asarray(out), np.asarray(ref),
                                   rtol=3e-2, atol=3e-2)

    print("KERNEL_OK")
</pallas_src>

<mosaic_0001>
module attributes {stable_mosaic.version = 11 : i64} {
  func.func @_gemm_stats_kernel(%arg0: i32, %arg1: memref<512x128xbf16, #tpu.memory_space<vmem>>, %arg2: memref<128x128xbf16, #tpu.memory_space<vmem>>, %arg3: memref<512x128xbf16, #tpu.memory_space<vmem>>, %arg4: memref<1x8x128xf32, #tpu.memory_space<vmem>>, %arg5: memref<1x8x128xf32, #tpu.memory_space<vmem>>) attributes {dimension_semantics = [#tpu.dimension_semantics<parallel>], iteration_bounds = array<i64: 1>, scalar_prefetch = 0 : i64, scratch_operands = 0 : i64, tpu.core_type = #tpu.core_type<tc>, window_params = [{transform_indices = @transform_0, window_bounds = array<i64: 512, 128>}, {pipeline_mode = #tpu.pipeline_mode<synchronous>, transform_indices = @transform_1, window_bounds = array<i64: 128, 128>}, {transform_indices = @transform_2, window_bounds = array<i64: 512, 128>}, {transform_indices = @transform_3, window_bounds = array<i64: 1, 8, 128>}, {transform_indices = @transform_4, window_bounds = array<i64: 1, 8, 128>}]} {
    %c0 = arith.constant 0 : index
    %c0_0 = arith.constant 0 : index
    %0 = vector.load %arg1[%c0, %c0_0] : memref<512x128xbf16, #tpu.memory_space<vmem>>, vector<512x128xbf16>
    %c0_1 = arith.constant 0 : index
    %c0_2 = arith.constant 0 : index
    %1 = vector.load %arg2[%c0_1, %c0_2] : memref<128x128xbf16, #tpu.memory_space<vmem>>, vector<128x128xbf16>
    %cst = arith.constant dense<0.000000e+00> : vector<512x128xf32>
    %2 = tpu.matmul %0, %1, %cst {dimension_numbers = #tpu.dot_dimension_numbers<[1], [0], [0], [1], [0, 0, 1, 1], [], []>} : vector<512x128xbf16>, vector<128x128xbf16>, vector<512x128xf32> -> vector<512x128xf32>
    %3 = arith.truncf %2 : vector<512x128xf32> to vector<512x128xbf16>
    %c0_3 = arith.constant 0 : index
    %c0_4 = arith.constant 0 : index
    %4 = vector.load %arg3[%c0_3, %c0_4] : memref<512x128xbf16, #tpu.memory_space<vmem>>, vector<512x128xbf16>
    tpu.vector_store %arg3[%c0_3, %c0_4], %3 {strides = array<i32>} : memref<512x128xbf16, #tpu.memory_space<vmem>>, vector<512x128xbf16>,
    %cst_5 = arith.constant dense<0.000000e+00> : vector<128xf32>
    %5 = vector.multi_reduction <add>, %2, %cst_5 [0] : vector<512x128xf32> to vector<128xf32>
    %6 = arith.mulf %2, %2 : vector<512x128xf32>
    %cst_6 = arith.constant dense<0.000000e+00> : vector<128xf32>
    %7 = vector.multi_reduction <add>, %6, %cst_6 [0] : vector<512x128xf32> to vector<128xf32>
    %8 = vector.shape_cast %5 : vector<128xf32> to vector<1x1x128xf32>
    %9 = vector.broadcast %8 : vector<1x1x128xf32> to vector<1x8x128xf32>
    %c0_7 = arith.constant 0 : index
    %c0_8 = arith.constant 0 : index
    %c0_9 = arith.constant 0 : index
    %10 = vector.load %arg4[%c0_7, %c0_8, %c0_9] : memref<1x8x128xf32, #tpu.memory_space<vmem>>, vector<1x8x128xf32>
    tpu.vector_store %arg4[%c0_7, %c0_8, %c0_9], %9 {strides = array<i32>} : memref<1x8x128xf32, #tpu.memory_space<vmem>>, vector<1x8x128xf32>,
    %11 = vector.shape_cast %7 : vector<128xf32> to vector<1x1x128xf32>
    %12 = vector.broadcast %11 : vector<1x1x128xf32> to vector<1x8x128xf32>
    %c0_10 = arith.constant 0 : index
    %c0_11 = arith.constant 0 : index
    %c0_12 = arith.constant 0 : index
    %13 = vector.load %arg5[%c0_10, %c0_11, %c0_12] : memref<1x8x128xf32, #tpu.memory_space<vmem>>, vector<1x8x128xf32>
    tpu.vector_store %arg5[%c0_10, %c0_11, %c0_12], %12 {strides = array<i32>} : memref<1x8x128xf32, #tpu.memory_space<vmem>>, vector<1x8x128xf32>,
    return
  }
  func.func @transform_0(%arg0: i32) -> (i32, i32) {
    %c0_i32 = arith.constant 0 : i32
    %c0_i32_0 = arith.constant 0 : i32
    return %arg0, %c0_i32 : i32, i32
  }
  func.func @transform_1(%arg0: i32) -> (i32, i32) {
    %c0_i32 = arith.constant 0 : i32
    %c0_i32_0 = arith.constant 0 : i32
    %c0_i32_1 = arith.constant 0 : i32
    return %c0_i32, %c0_i32_0 : i32, i32
  }
  func.func @transform_2(%arg0: i32) -> (i32, i32) {
    %c0_i32 = arith.constant 0 : i32
    %c0_i32_0 = arith.constant 0 : i32
    return %arg0, %c0_i32 : i32, i32
  }
  func.func @transform_3(%arg0: i32) -> (i32, i32, i32) {
    %c0_i32 = arith.constant 0 : i32
    %c0_i32_0 = arith.constant 0 : i32
    %c0_i32_1 = arith.constant 0 : i32
    return %arg0, %c0_i32, %c0_i32_0 : i32, i32, i32
  }
  func.func @transform_4(%arg0: i32) -> (i32, i32, i32) {
    %c0_i32 = arith.constant 0 : i32
    %c0_i32_0 = arith.constant 0 : i32
    %c0_i32_1 = arith.constant 0 : i32
    return %arg0, %c0_i32, %c0_i32_0 : i32, i32, i32
  }
}

</mosaic_0001>

<llo_original>
// kernel: tpu_custom_call.1
$region0: #{tpu_custom_call.1}
  #allocation0 [shape = 'u32[]', space=smem, size = 0x4, offset = 0x4, fixed_abs, tag = 'smem constant byte address 0x4 - core index']
  #allocation1 [shape = 'u32[144,128]{1,0:T(1,128)}', space=vmem, size = 0x12000, scoped, tag = 'internal scratch']
  %s0 = inlined_call_operand.hbm [shape: bf16[512,128], index: 0, kind: input, shape index: {}]
  %s1 = inlined_call_operand.hbm [shape: bf16[128,128], index: 1, kind: input, shape index: {}]
  %s2 = inlined_call_operand.hbm [shape: bf16[512,128], index: 2, kind: output, shape index: {0}]
  %s3 = inlined_call_operand.hbm [shape: f32[1,8,128], index: 3, kind: output, shape index: {1}]
  %s4 = inlined_call_operand.hbm [shape: f32[1,8,128], index: 4, kind: output, shape index: {2}]
  %5 = xla_tuple %s2, %s3, %s4
  %s6 = sld [smem:[#allocation0]]
  $region42: #{tpu_custom_call.1} parent=0
    _
  %s8 = ssub.s32 1, %s6
  %s9 = scalar_select 0, %s8, %s6
  $region1: #{tpu_custom_call.1} parent=0
    #allocation2 [shape = 'u8[131072]{0}', space=vmem, size = 0x20000, scoped, tag = 'input window, operand 0, single buffered']
    #allocation3 [shape = 's32[1]{0}', space=sflag, size = 0x4, scoped, tag = 'scoped memory for tpu_custom_call.1']
    #allocation4 [shape = 's32[1]{0}', space=sflag, size = 0x4, scoped, tag = 'scoped memory for tpu_custom_call.1']
    #allocation5 [shape = 'u8[32768]{0}', space=vmem, size = 0x8000, scoped, tag = 'input window, operand 1, single buffered']
    #allocation6 [shape = 's32[1]{0}', space=sflag, size = 0x4, scoped, tag = 'scoped memory for tpu_custom_call.1']
    #allocation7 [shape = 'u8[131072]{0}', space=vmem, size = 0x20000, scoped, tag = 'output window, operand 0, single buffered']
    #allocation8 [shape = 'u8[4096]{0}', space=vmem, size = 0x1000, scoped, tag = 'output window, operand 1, single buffered']
    #allocation9 [shape = 's32[1]{0}', space=sflag, size = 0x4, scoped, tag = 'scoped memory for tpu_custom_call.1']
    #allocation10 [shape = 'u8[4096]{0}', space=vmem, size = 0x1000, scoped, tag = 'output window, operand 2, single buffered']
    %10 = vsyncpa [#allocation3], 0
    %11 = vsyncpa [#allocation6], 0
    %12 = vsyncpa [#allocation4], 0
    %13 = vsyncpa [#allocation9], 0
    // Predicated region
    $region2: #{tpu_custom_call.1} parent=1 // pred_check
      _
    $region3: #{tpu_custom_call.1} parent=1 // pred_check_branch
      %15 = sbr.rel (0) target = $region5
    $region4: #{tpu_custom_call.1} parent=1 // pred_region
      %s17 = ssub.s32 4096, 4096
      %18 = vsyncadd [#allocation3], %s17
      %s19 = sshll.u32 [#allocation2], 4
      %s20 = int_to_ptr.vmem [resolvable:$true] %s19
      %25 = dma.hbm_to_vmem [thread:$0]  %s0, 4096, %s20, [#allocation3], 64, 64, 4
    $region5: #{tpu_custom_call.1} parent=1 // pred_fallthru
      _
    // Predicated region
    $region6: #{tpu_custom_call.1} parent=1 // pred_check
      _
    $region7: #{tpu_custom_call.1} parent=1 // pred_check_branch
      %27 = sbr.rel (0) target = $region9
    $region8: #{tpu_custom_call.1} parent=1 // pred_region
      %s29 = ssub.s32 1024, 1024
      %30 = vsyncadd [#allocation6], %s29
      %s31 = sshll.u32 [#allocation5], 4
      %s32 = int_to_ptr.vmem [resolvable:$true] %s31
      %37 = dma.hbm_to_vmem [thread:$0]  %s1, 1024, %s32, [#allocation6], 64, 64, 4
    $region9: #{tpu_custom_call.1} parent=1 // pred_fallthru
      _
    // Predicated region
    $region10: #{tpu_custom_call.1} parent=1 // pred_check
      _
    $region11: #{tpu_custom_call.1} parent=1 // pred_check_branch
      %39 = sbr.rel (0) target = $region13
    $region12: #{tpu_custom_call.1} parent=1 // pred_region
      %40 = dma.done [#allocation3], 4096
    $region13: #{tpu_custom_call.1} parent=1 // pred_fallthru
      _
    // Predicated region
    $region14: #{tpu_custom_call.1} parent=1 // pred_check
      _
    $region15: #{tpu_custom_call.1} parent=1 // pred_check_branch
      %42 = sbr.rel (0) target = $region17
    $region16: #{tpu_custom_call.1} parent=1 // pred_region
      %43 = dma.done [#allocation6], 1024
    $region17: #{tpu_custom_call.1} parent=1 // pred_fallthru
      _
    %v45 = vld [vmem:[#allocation2] sm:$0xf]
    %v46 = vld [vmem:[#allocation2 + $0x4] sm:$0xf]
    %v47 = vld [vmem:[#allocation2 + $0x8] sm:$0xf]
    %v48 = vld [vmem:[#allocation2 + $0xc] sm:$0xf]
    %v49 = vld [vmem:[#allocation2 + $0x10] sm:$0xf]
    %v50 = vld [vmem:[#allocation2 + $0x14] sm:$0xf]
    %v51 = vld [vmem:[#allocation2 + $0x18] sm:$0xf]
    %v52 = vld [vmem:[#allocation2 + $0x1c] sm:$0xf]
    %v53 = vld [vmem:[#allocation2 + $0x20] sm:$0xf]
    %v54 = vld [vmem:[#allocation2 + $0x24] sm:$0xf]
    %v55 = vld [vmem:[#allocation2 + $0x28] sm:$0xf]
    %v56 = vld [vmem:[#allocation2 + $0x2c] sm:$0xf]
    %v57 = vld [vmem:[#allocation2 + $0x30] sm:$0xf]
    %v58 = vld [vmem:[#allocation2 + $0x34] sm:$0xf]
    %v59 = vld [vmem:[#allocation2 + $0x38] sm:$0xf]
    %v60 = vld [vmem:[#allocation2 + $0x3c] sm:$0xf]
    %v61 = vld [vmem:[#allocation2 + $0x40] sm:$0xf]
    %v62 = vld [vmem:[#allocation2 + $0x44] sm:$0xf]
    %v63 = vld [vmem:[#allocation2 + $0x48] sm:$0xf]
    %v64 = vld [vmem:[#allocation2 + $0x4c] sm:$0xf]
    %v65 = vld [vmem:[#allocation2 + $0x50] sm:$0xf]
    %v66 = vld [vmem:[#allocation2 + $0x54] sm:$0xf]
    %v67 = vld [vmem:[#allocation2 + $0x58] sm:$0xf]
    %v68 = vld [vmem:[#allocation2 + $0x5c] sm:$0xf]
    %v69 = vld [vmem:[#allocation2 + $0x60] sm:$0xf]
    %v70 = vld [vmem:[#allocation2 + $0x64] sm:$0xf]
    %v71 = vld [vmem:[#allocation2 + $0x68] sm:$0xf]
    %v72 = vld [vmem:[#allocation2 + $0x6c] sm:$0xf]
    %v73 = vld [vmem:[#allocation2 + $0x70] sm:$0xf]
    %v74 = vld [vmem:[#allocation2 + $0x74] sm:$0xf]
    %v75 = vld [vmem:[#allocation2 + $0x78] sm:$0xf]
    %v76 = vld [vmem:[#allocation2 + $0x7c] sm:$0xf]
    %v77 = vld [vmem:[#allocation2 + $0x80] sm:$0xf]
    %v78 = vld [vmem:[#allocation2 + $0x84] sm:$0xf]
    %v79 = vld [vmem:[#allocation2 + $0x88] sm:$0xf]
    %v80 = vld [vmem:[#allocation2 + $0x8c] sm:$0xf]
    %v81 = vld [vmem:[#allocation2 + $0x90] sm:$0xf]
    %v82 = vld [vmem:[#allocation2 + $0x94] sm:$0xf]
    %v83 = vld [vmem:[#allocation2 + $0x98] sm:$0xf]
    %v84 = vld [vmem:[#allocation2 + $0x9c] sm:$0xf]
    %v85 = vld [vmem:[#allocation2 + $0xa0] sm:$0xf]
    %v86 = vld [vmem:[#allocation2 + $0xa4] sm:$0xf]
    %v87 = vld [vmem:[#allocation2 + $0xa8] sm:$0xf]
    %v88 = vld [vmem:[#allocation2 + $0xac] sm:$0xf]
    %v89 = vld [vmem:[#allocation2 + $0xb0] sm:$0xf]
    %v90 = vld [vmem:[#allocation2 + $0xb4] sm:$0xf]
    %v91 = vld [vmem:[#allocation2 + $0xb8] sm:$0xf]
    %v92 = vld [vmem:[#allocation2 + $0xbc] sm:$0xf]
    %v93 = vld [vmem:[#allocation2 + $0xc0] sm:$0xf]
    %v94 = vld [vmem:[#allocation2 + $0xc4] sm:$0xf]
    %v95 = vld [vmem:[#allocation2 + $0xc8] sm:$0xf]
    %v96 = vld [vmem:[#allocation2 + $0xcc] sm:$0xf]
    %v97 = vld [vmem:[#allocation2 + $0xd0] sm:$0xf]
    %v98 = vld [vmem:[#allocation2 + $0xd4] sm:$0xf]
    %v99 = vld [vmem:[#allocation2 + $0xd8] sm:$0xf]
    %v100 = vld [vmem:[#allocation2 + $0xdc] sm:$0xf]
    %v101 = vld [vmem:[#allocation2 + $0xe0] sm:$0xf]
    %v102 = vld [vmem:[#allocation2 + $0xe4] sm:$0xf]
    %v103 = vld [vmem:[#allocation2 + $0xe8] sm:$0xf]
    %v104 = vld [vmem:[#allocation2 + $0xec] sm:$0xf]
    %v105 = vld [vmem:[#allocation2 + $0xf0] sm:$0xf]
    %v106 = vld [vmem:[#allocation2 + $0xf4] sm:$0xf]
    %v107 = vld [vmem:[#allocation2 + $0xf8] sm:$0xf]
    %v108 = vld [vmem:[#allocation2 + $0xfc] sm:$0xf]
    %v109 = vld [vmem:[#allocation5] sm:$0xf]
    %v110 = vld [vmem:[#allocation5 + $0x4] sm:$0xf]
    %v111 = vld [vmem:[#allocation5 + $0x8] sm:$0xf]
    %v112 = vld [vmem:[#allocation5 + $0xc] sm:$0xf]
    %v113 = vld [vmem:[#allocation5 + $0x10] sm:$0xf]
    %v114 = vld [vmem:[#allocation5 + $0x14] sm:$0xf]
    %v115 = vld [vmem:[#allocation5 + $0x18] sm:$0xf]
    %v116 = vld [vmem:[#allocation5 + $0x1c] sm:$0xf]
    %v117 = vld [vmem:[#allocation5 + $0x20] sm:$0xf]
    %v118 = vld [vmem:[#allocation5 + $0x24] sm:$0xf]
    %v119 = vld [vmem:[#allocation5 + $0x28] sm:$0xf]
    %v120 = vld [vmem:[#allocation5 + $0x2c] sm:$0xf]
    %v121 = vld [vmem:[#allocation5 + $0x30] sm:$0xf]
    %v122 = vld [vmem:[#allocation5 + $0x34] sm:$0xf]
    %v123 = vld [vmem:[#allocation5 + $0x38] sm:$0xf]
    %v124 = vld [vmem:[#allocation5 + $0x3c] sm:$0xf]
    %v189 = vunpack.c.l.b16 %v45
    %v190 = vunpack.c.l.b16 %v46
    %v191 = vunpack.c.l.b16 %v47
    %v192 = vunpack.c.l.b16 %v48
    %v193 = vunpack.c.l.b16 %v49
    %v194 = vunpack.c.l.b16 %v50
    %v195 = vunpack.c.l.b16 %v51
    %v196 = vunpack.c.l.b16 %v52
    %v197 = vunpack.c.l.b16 %v53
    %v198 = vunpack.c.l.b16 %v54
    %v199 = vunpack.c.l.b16 %v55
    %v200 = vunpack.c.l.b16 %v56
    %v201 = vunpack.c.l.b16 %v57
    %v202 = vunpack.c.l.b16 %v58
    %v203 = vunpack.c.l.b16 %v59
    %v204 = vunpack.c.l.b16 %v60
    %v205 = vunpack.c.l.b16 %v61
    %v206 = vunpack.c.l.b16 %v62
    %v207 = vunpack.c.l.b16 %v63
    %v208 = vunpack.c.l.b16 %v64
    %v209 = vunpack.c.l.b16 %v65
    %v210 = vunpack.c.l.b16 %v66
    %v211 = vunpack.c.l.b16 %v67
    %v212 = vunpack.c.l.b16 %v68
    %v213 = vunpack.c.l.b16 %v69
    %v214 = vunpack.c.l.b16 %v70
    %v215 = vunpack.c.l.b16 %v71
    %v216 = vunpack.c.l.b16 %v72
    %v217 = vunpack.c.l.b16 %v73
    %v218 = vunpack.c.l.b16 %v74
    %v219 = vunpack.c.l.b16 %v75
    %v220 = vunpack.c.l.b16 %v76
    %v221 = vunpack.c.l.b16 %v77
    %v222 = vunpack.c.l.b16 %v78
    %v223 = vunpack.c.l.b16 %v79
    %v224 = vunpack.c.l.b16 %v80
    %v225 = vunpack.c.l.b16 %v81
    %v226 = vunpack.c.l.b16 %v82
    %v227 = vunpack.c.l.b16 %v83
    %v228 = vunpack.c.l.b16 %v84
    %v229 = vunpack.c.l.b16 %v85
    %v230 = vunpack.c.l.b16 %v86
    %v231 = vunpack.c.l.b16 %v87
    %v232 = vunpack.c.l.b16 %v88
    %v233 = vunpack.c.l.b16 %v89
    %v234 = vunpack.c.l.b16 %v90
    %v235 = vunpack.c.l.b16 %v91
    %v236 = vunpack.c.l.b16 %v92
    %v237 = vunpack.c.l.b16 %v93
    %v238 = vunpack.c.l.b16 %v94
    %v239 = vunpack.c.l.b16 %v95
    %v240 = vunpack.c.l.b16 %v96
    %v241 = vunpack.c.l.b16 %v97
    %v242 = vunpack.c.l.b16 %v98
    %v243 = vunpack.c.l.b16 %v99
    %v244 = vunpack.c.l.b16 %v100
    %v245 = vunpack.c.l.b16 %v101
    %v246 = vunpack.c.l.b16 %v102
    %v247 = vunpack.c.l.b16 %v103
    %v248 = vunpack.c.l.b16 %v104
    %v249 = vunpack.c.l.b16 %v105
    %v250 = vunpack.c.l.b16 %v106
    %v251 = vunpack.c.l.b16 %v107
    %v252 = vunpack.c.l.b16 %v108
    %v253 = vpack.c.b16 %v190, %v189
    %v254 = vpack.c.b16 %v192, %v191
    %v255 = vpack.c.b16 %v194, %v193
    %v256 = vpack.c.b16 %v196, %v195
    %v257 = vpack.c.b16 %v198, %v197
    %v258 = vpack.c.b16 %v200, %v199
    %v259 = vpack.c.b16 %v202, %v201
    %v260 = vpack.c.b16 %v204, %v203
    %v261 = vpack.c.b16 %v206, %v205
    %v262 = vpack.c.b16 %v208, %v207
    %v263 = vpack.c.b16 %v210, %v209
    %v264 = vpack.c.b16 %v212, %v211
    %v265 = vpack.c.b16 %v214, %v213
    %v266 = vpack.c.b16 %v216, %v215
    %v267 = vpack.c.b16 %v218, %v217
    %v268 = vpack.c.b16 %v220, %v219
    %v269 = vpack.c.b16 %v222, %v221
    %v270 = vpack.c.b16 %v224, %v223
    %v271 = vpack.c.b16 %v226, %v225
    %v272 = vpack.c.b16 %v228, %v227
    %v273 = vpack.c.b16 %v230, %v229
    %v274 = vpack.c.b16 %v232, %v231
    %v275 = vpack.c.b16 %v234, %v233
    %v276 = vpack.c.b16 %v236, %v235
    %v277 = vpack.c.b16 %v238, %v237
    %v278 = vpack.c.b16 %v240, %v239
    %v279 = vpack.c.b16 %v242, %v241
    %v280 = vpack.c.b16 %v244, %v243
    %v281 = vpack.c.b16 %v246, %v245
    %v282 = vpack.c.b16 %v248, %v247
    %v283 = vpack.c.b16 %v250, %v249
    %v284 = vpack.c.b16 %v252, %v251
    %v333 = vunpack.c.l.b16 %v109
    %v334 = vunpack.c.l.b16 %v110
    %v335 = vunpack.c.l.b16 %v111
    %v336 = vunpack.c.l.b16 %v112
    %v337 = vunpack.c.l.b16 %v113
    %v338 = vunpack.c.l.b16 %v114
    %v339 = vunpack.c.l.b16 %v115
    %v340 = vunpack.c.l.b16 %v116
    %v341 = vunpack.c.l.b16 %v117
    %v342 = vunpack.c.l.b16 %v118
    %v343 = vunpack.c.l.b16 %v119
    %v344 = vunpack.c.l.b16 %v120
    %v345 = vunpack.c.l.b16 %v121
    %v346 = vunpack.c.l.b16 %v122
    %v347 = vunpack.c.l.b16 %v123
    %v348 = vunpack.c.l.b16 %v124
    %v349 = vpack.c.b16 %v334, %v333
    %v350 = vpack.c.b16 %v336, %v335
    %v351 = vpack.c.b16 %v338, %v337
    %v352 = vpack.c.b16 %v340, %v339
    %v353 = vpack.c.b16 %v342, %v341
    %v354 = vpack.c.b16 %v344, %v343
    %v355 = vpack.c.b16 %v346, %v345
    %v356 = vpack.c.b16 %v348, %v347
    %365 = vmatprep.subr.bf16.mxu0 0
    %366 = vmatpush1.bf16.msra.mxu0 %v356
    %367 = vmatprep.subr.bf16.mxu0 0
    %368 = vmatpush1.bf16.msra.mxu0 %v355
    %369 = vmatprep.subr.bf16.mxu0 0
    %370 = vmatpush1.bf16.msra.mxu0 %v354
    %371 = vmatprep.subr.bf16.mxu0 0
    %372 = vmatpush1.bf16.msra.mxu0 %v353
    %373 = vmatprep.subr.bf16.mxu0 0
    %374 = vmatpush1.bf16.msra.mxu0 %v352
    %375 = vmatprep.subr.bf16.mxu0 0
    %376 = vmatpush1.bf16.msra.mxu0 %v351
    %377 = vmatprep.subr.bf16.mxu0 0
    %378 = vmatpush1.bf16.msra.mxu0 %v350
    %379 = vmatprep.subr.bf16.mxu0 0
    %380 = vmatpush1.bf16.msra.mxu0 %v349
    %381 = vmatprep.subr.bf16.mxu0 0
    %382 = vmatpush2.bf16.msra.mxu0 0
    %383 = vmatprep.subr.bf16.mxu0 0
    %384 = vmatpush2.bf16.msra.mxu0 0
    %385 = vmatprep.subr.bf16.mxu0 0
    %386 = vmatpush2.bf16.msra.mxu0 0
    %387 = vmatprep.subr.bf16.mxu0 0
    %388 = vmatpush2.bf16.msra.mxu0 0
    %389 = vmatprep.subr.bf16.mxu0 0
    %390 = vmatpush2.bf16.msra.mxu0 0
    %391 = vmatprep.subr.bf16.mxu0 0
    %392 = vmatpush2.bf16.msra.mxu0 0
    %393 = vmatprep.subr.bf16.mxu0 0
    %394 = vmatpush2.bf16.msra.mxu0 0
    %395 = vmatprep.subr.bf16.mxu0 0
    %396 = vmatpush2.bf16.msra.mxu0 0
    %397 = vmatprep.mubr.bf16.mxu0 0
    %398 = vmatmul.mubr.bf16.gmra.mxu0 %v253
    %v399 = vpop.f32.mrf.mxu0
    %v400 = vadd.f32 0.0, %v399
    %v401 = vpop.f32.mrf.mxu0
    %v402 = vpop.f32.mrf.mxu0
    %v403 = vadd.f32 0.0, %v402
    %v404 = vpop.f32.mrf.mxu0
    %405 = vmatprep.mubr.bf16.mxu0 0
    %406 = vmatmul.mubr.bf16.gmra.mxu0 %v254
    %v407 = vpop.f32.mrf.mxu0
    %v408 = vadd.f32 0.0, %v407
    %v409 = vpop.f32.mrf.mxu0
    %v410 = vpop.f32.mrf.mxu0
    %v411 = vadd.f32 0.0, %v410
    %v412 = vpop.f32.mrf.mxu0
    %413 = vmatprep.mubr.bf16.mxu0 0
    %414 = vmatmul.mubr.bf16.gmra.mxu0 %v255
    %v415 = vpop.f32.mrf.mxu0
    %v416 = vadd.f32 0.0, %v415
    %v417 = vpop.f32.mrf.mxu0
    %v418 = vpop.f32.mrf.mxu0
    %v419 = vadd.f32 0.0, %v418
    %v420 = vpop.f32.mrf.mxu0
    %421 = vmatprep.mubr.bf16.mxu0 0
    %422 = vmatmul.mubr.bf16.gmra.mxu0 %v256
    %v423 = vpop.f32.mrf.mxu0
    %v424 = vadd.f32 0.0, %v423
    %v425 = vpop.f32.mrf.mxu0
    %v426 = vpop.f32.mrf.mxu0
    %v427 = vadd.f32 0.0, %v426
    %v428 = vpop.f32.mrf.mxu0
    %429 = vmatprep.mubr.bf16.mxu0 0
    %430 = vmatmul.mubr.bf16.gmra.mxu0 %v257
    %v431 = vpop.f32.mrf.mxu0
    %v432 = vadd.f32 0.0, %v431
    %v433 = vpop.f32.mrf.mxu0
    %v434 = vpop.f32.mrf.mxu0
    %v435 = vadd.f32 0.0, %v434
    %v436 = vpop.f32.mrf.mxu0
    %437 = vmatprep.mubr.bf16.mxu0 0
    %438 = vmatmul.mubr.bf16.gmra.mxu0 %v258
    %v439 = vpop.f32.mrf.mxu0
    %v440 = vadd.f32 0.0, %v439
    %v441 = vpop.f32.mrf.mxu0
    %v442 = vpop.f32.mrf.mxu0
    %v443 = vadd.f32 0.0, %v442
    %v444 = vpop.f32.mrf.mxu0
    %445 = vmatprep.mubr.bf16.mxu0 0
    %446 = vmatmul.mubr.bf16.gmra.mxu0 %v259
    %v447 = vpop.f32.mrf.mxu0
    %v448 = vadd.f32 0.0, %v447
    %v449 = vpop.f32.mrf.mxu0
    %v450 = vpop.f32.mrf.mxu0
    %v451 = vadd.f32 0.0, %v450
    %v452 = vpop.f32.mrf.mxu0
    %453 = vmatprep.mubr.bf16.mxu0 0
    %454 = vmatmul.mubr.bf16.gmra.mxu0 %v260
    %v455 = vpop.f32.mrf.mxu0
    %v456 = vadd.f32 0.0, %v455
    %v457 = vpop.f32.mrf.mxu0
    %v458 = vpop.f32.mrf.mxu0
    %v459 = vadd.f32 0.0, %v458
    %v460 = vpop.f32.mrf.mxu0
    %461 = vmatprep.mubr.bf16.mxu0 0
    %462 = vmatmul.mubr.bf16.gmra.mxu0 %v261
    %v463 = vpop.f32.mrf.mxu0
    %v464 = vadd.f32 0.0, %v463
    %v465 = vpop.f32.mrf.mxu0
    %v466 = vpop.f32.mrf.mxu0
    %v467 = vadd.f32 0.0, %v466
    %v468 = vpop.f32.mrf.mxu0
    %469 = vmatprep.mubr.bf16.mxu0 0
    %470 = vmatmul.mubr.bf16.gmra.mxu0 %v262
    %v471 = vpop.f32.mrf.mxu0
    %v472 = vadd.f32 0.0, %v471
    %v473 = vpop.f32.mrf.mxu0
    %v474 = vpop.f32.mrf.mxu0
    %v475 = vadd.f32 0.0, %v474
    %v476 = vpop.f32.mrf.mxu0
    %477 = vmatprep.mubr.bf16.mxu0 0
    %478 = vmatmul.mubr.bf16.gmra.mxu0 %v263
    %v479 = vpop.f32.mrf.mxu0
    %v480 = vadd.f32 0.0, %v479
    %v481 = vpop.f32.mrf.mxu0
    %v482 = vpop.f32.mrf.mxu0
    %v483 = vadd.f32 0.0, %v482
    %v484 = vpop.f32.mrf.mxu0
    %485 = vmatprep.mubr.bf16.mxu0 0
    %486 = vmatmul.mubr.bf16.gmra.mxu0 %v264
    %v487 = vpop.f32.mrf.mxu0
    %v488 = vadd.f32 0.0, %v487
    %v489 = vpop.f32.mrf.mxu0
    %v490 = vpop.f32.mrf.mxu0
    %v491 = vadd.f32 0.0, %v490
    %v492 = vpop.f32.mrf.mxu0
    %493 = vmatprep.mubr.bf16.mxu0 0
    %494 = vmatmul.mubr.bf16.gmra.mxu0 %v265
    %v495 = vpop.f32.mrf.mxu0
    %v496 = vadd.f32 0.0, %v495
    %v497 = vpop.f32.mrf.mxu0
    %v498 = vpop.f32.mrf.mxu0
    %v499 = vadd.f32 0.0, %v498
    %v500 = vpop.f32.mrf.mxu0
    %501 = vmatprep.mubr.bf16.mxu0 0
    %502 = vmatmul.mubr.bf16.gmra.mxu0 %v266
    %v503 = vpop.f32.mrf.mxu0
    %v504 = vadd.f32 0.0, %v503
    %v505 = vpop.f32.mrf.mxu0
    %v506 = vpop.f32.mrf.mxu0
    %v507 = vadd.f32 0.0, %v506
    %v508 = vpop.f32.mrf.mxu0
    %509 = vmatprep.mubr.bf16.mxu0 0
    %510 = vmatmul.mubr.bf16.gmra.mxu0 %v267
    %v511 = vpop.f32.mrf.mxu0
    %v512 = vadd.f32 0.0, %v511
    %v513 = vpop.f32.mrf.mxu0
    %v514 = vpop.f32.mrf.mxu0
    %v515 = vadd.f32 0.0, %v514
    %v516 = vpop.f32.mrf.mxu0
    %517 = vmatprep.mubr.bf16.mxu0 0
    %518 = vmatmul.mubr.bf16.gmra.mxu0 %v268
    %v519 = vpop.f32.mrf.mxu0
    %v520 = vadd.f32 0.0, %v519
    %v521 = vpop.f32.mrf.mxu0
    %v522 = vpop.f32.mrf.mxu0
    %v523 = vadd.f32 0.0, %v522
    %v524 = vpop.f32.mrf.mxu0
    %525 = vmatprep.mubr.bf16.mxu0 0
    %526 = vmatmul.mubr.bf16.gmra.mxu0 %v269
    %v527 = vpop.f32.mrf.mxu0
    %v528 = vadd.f32 0.0, %v527
    %v529 = vpop.f32.mrf.mxu0
    %v530 = vpop.f32.mrf.mxu0
    %v531 = vadd.f32 0.0, %v530
    %v532 = vpop.f32.mrf.mxu0
    %533 = vmatprep.mubr.bf16.mxu0 0
    %534 = vmatmul.mubr.bf16.gmra.mxu0 %v270
    %v535 = vpop.f32.mrf.mxu0
    %v536 = vadd.f32 0.0, %v535
    %v537 = vpop.f32.mrf.mxu0
    %v538 = vpop.f32.mrf.mxu0
    %v539 = vadd.f32 0.0, %v538
    %v540 = vpop.f32.mrf.mxu0
    %541 = vmatprep.mubr.bf16.mxu0 0
    %542 = vmatmul.mubr.bf16.gmra.mxu0 %v271
    %v543 = vpop.f32.mrf.mxu0
    %v544 = vadd.f32 0.0, %v543
    %v545 = vpop.f32.mrf.mxu0
    %v546 = vpop.f32.mrf.mxu0
    %v547 = vadd.f32 0.0, %v546
    %v548 = vpop.f32.mrf.mxu0
    %549 = vmatprep.mubr.bf16.mxu0 0
    %550 = vmatmul.mubr.bf16.gmra.mxu0 %v272
    %v551 = vpop.f32.mrf.mxu0
    %v552 = vadd.f32 0.0, %v551
    %v553 = vpop.f32.mrf.mxu0
    %v554 = vpop.f32.mrf.mxu0
    %v555 = vadd.f32 0.0, %v554
    %v556 = vpop.f32.mrf.mxu0
    %557 = vmatprep.mubr.bf16.mxu0 0
    %558 = vmatmul.mubr.bf16.gmra.mxu0 %v273
    %v559 = vpop.f32.mrf.mxu0
    %v560 = vadd.f32 0.0, %v559
    %v561 = vpop.f32.mrf.mxu0
    %v562 = vpop.f32.mrf.mxu0
    %v563 = vadd.f32 0.0, %v562
    %v564 = vpop.f32.mrf.mxu0
    %565 = vmatprep.mubr.bf16.mxu0 0
    %566 = vmatmul.mubr.bf16.gmra.mxu0 %v274
    %v567 = vpop.f32.mrf.mxu0
    %v568 = vadd.f32 0.0, %v567
    %v569 = vpop.f32.mrf.mxu0
    %v570 = vpop.f32.mrf.mxu0
    %v571 = vadd.f32 0.0, %v570
    %v572 = vpop.f32.mrf.mxu0
    %573 = vmatprep.mubr.bf16.mxu0 0
    %574 = vmatmul.mubr.bf16.gmra.mxu0 %v275
    %v575 = vpop.f32.mrf.mxu0
    %v576 = vadd.f32 0.0, %v575
    %v577 = vpop.f32.mrf.mxu0
    %v578 = vpop.f32.mrf.mxu0
    %v579 = vadd.f32 0.0, %v578
    %v580 = vpop.f32.mrf.mxu0
    %581 = vmatprep.mubr.bf16.mxu0 0
    %582 = vmatmul.mubr.bf16.gmra.mxu0 %v276
    %v583 = vpop.f32.mrf.mxu0
    %v584 = vadd.f32 0.0, %v583
    %v585 = vpop.f32.mrf.mxu0
    %v586 = vpop.f32.mrf.mxu0
    %v587 = vadd.f32 0.0, %v586
    %v588 = vpop.f32.mrf.mxu0
    %589 = vmatprep.mubr.bf16.mxu0 0
    %590 = vmatmul.mubr.bf16.gmra.mxu0 %v277
    %v591 = vpop.f32.mrf.mxu0
    %v592 = vadd.f32 0.0, %v591
    %v593 = vpop.f32.mrf.mxu0
    %v594 = vpop.f32.mrf.mxu0
    %v595 = vadd.f32 0.0, %v594
    %v596 = vpop.f32.mrf.mxu0
    %597 = vmatprep.mubr.bf16.mxu0 0
    %598 = vmatmul.mubr.bf16.gmra.mxu0 %v278
    %v599 = vpop.f32.mrf.mxu0
    %v600 = vadd.f32 0.0, %v599
    %v601 = vpop.f32.mrf.mxu0
    %v602 = vpop.f32.mrf.mxu0
    %v603 = vadd.f32 0.0, %v602
    %v604 = vpop.f32.mrf.mxu0
    %605 = vmatprep.mubr.bf16.mxu0 0
    %606 = vmatmul.mubr.bf16.gmra.mxu0 %v279
    %v607 = vpop.f32.mrf.mxu0
    %v608 = vadd.f32 0.0, %v607
    %v609 = vpop.f32.mrf.mxu0
    %v610 = vpop.f32.mrf.mxu0
    %v611 = vadd.f32 0.0, %v610
    %v612 = vpop.f32.mrf.mxu0
    %613 = vmatprep.mubr.bf16.mxu0 0
    %614 = vmatmul.mubr.bf16.gmra.mxu0 %v280
    %v615 = vpop.f32.mrf.mxu0
    %v616 = vadd.f32 0.0, %v615
    %v617 = vpop.f32.mrf.mxu0
    %v618 = vpop.f32.mrf.mxu0
    %v619 = vadd.f32 0.0, %v618
    %v620 = vpop.f32.mrf.mxu0
    %621 = vmatprep.mubr.bf16.mxu0 0
    %622 = vmatmul.mubr.bf16.gmra.mxu0 %v281
    %v623 = vpop.f32.mrf.mxu0
    %v624 = vadd.f32 0.0, %v623
    %v625 = vpop.f32.mrf.mxu0
    %v626 = vpop.f32.mrf.mxu0
    %v627 = vadd.f32 0.0, %v626
    %v628 = vpop.f32.mrf.mxu0
    %629 = vmatprep.mubr.bf16.mxu0 0
    %630 = vmatmul.mubr.bf16.gmra.mxu0 %v282
    %v631 = vpop.f32.mrf.mxu0
    %v632 = vadd.f32 0.0, %v631
    %v633 = vpop.f32.mrf.mxu0
    %v634 = vpop.f32.mrf.mxu0
    %v635 = vadd.f32 0.0, %v634
    %v636 = vpop.f32.mrf.mxu0
    %637 = vmatprep.mubr.bf16.mxu0 0
    %638 = vmatmul.mubr.bf16.gmra.mxu0 %v283
    %v639 = vpop.f32.mrf.mxu0
    %v640 = vadd.f32 0.0, %v639
    %v641 = vpop.f32.mrf.mxu0
    %v642 = vpop.f32.mrf.mxu0
    %v643 = vadd.f32 0.0, %v642
    %v644 = vpop.f32.mrf.mxu0
    %645 = vmatprep.mubr.bf16.mxu0 0
    %646 = vmatmul.mubr.bf16.gmra.mxu0 %v284
    %v647 = vpop.f32.mrf.mxu0
    %v648 = vadd.f32 0.0, %v647
    %v649 = vpop.f32.mrf.mxu0
    %v650 = vpop.f32.mrf.mxu0
    %v651 = vadd.f32 0.0, %v650
    %v652 = vpop.f32.mrf.mxu0
    %653 = vdwg.mxu0
    %v654 = vpack.c.bf16 %v403, %v400
    %v655 = vpack.c.bf16 %v411, %v408
    %v656 = vpack.c.bf16 %v419, %v416
    %v657 = vpack.c.bf16 %v427, %v424
    %v658 = vpack.c.bf16 %v435, %v432
    %v659 = vpack.c.bf16 %v443, %v440
    %v660 = vpack.c.bf16 %v451, %v448
    %v661 = vpack.c.bf16 %v459, %v456
    %v662 = vpack.c.bf16 %v467, %v464
    %v663 = vpack.c.bf16 %v475, %v472
    %v664 = vpack.c.bf16 %v483, %v480
    %v665 = vpack.c.bf16 %v491, %v488
    %v666 = vpack.c.bf16 %v499, %v496
    %v667 = vpack.c.bf16 %v507, %v504
    %v668 = vpack.c.bf16 %v515, %v512
    %v669 = vpack.c.bf16 %v523, %v520
    %v670 = vpack.c.bf16 %v531, %v528
    %v671 = vpack.c.bf16 %v539, %v536
    %v672 = vpack.c.bf16 %v547, %v544
    %v673 = vpack.c.bf16 %v555, %v552
    %v674 = vpack.c.bf16 %v563, %v560
    %v675 = vpack.c.bf16 %v571, %v568
    %v676 = vpack.c.bf16 %v579, %v576
    %v677 = vpack.c.bf16 %v587, %v584
    %v678 = vpack.c.bf16 %v595, %v592
    %v679 = vpack.c.bf16 %v603, %v600
    %v680 = vpack.c.bf16 %v611, %v608
    %v681 = vpack.c.bf16 %v619, %v616
    %v682 = vpack.c.bf16 %v627, %v624
    %v683 = vpack.c.bf16 %v635, %v632
    %v684 = vpack.c.bf16 %v643, %v640
    %v685 = vpack.c.bf16 %v651, %v648
    %v718 = vunpack.c.l.b16 %v654
    %v719 = vunpack.c.h.b16 %v654
    %v720 = vunpack.c.l.b16 %v655
    %v721 = vunpack.c.h.b16 %v655
    %v722 = vunpack.c.l.b16 %v656
    %v723 = vunpack.c.h.b16 %v656
    %v724 = vunpack.c.l.b16 %v657
    %v725 = vunpack.c.h.b16 %v657
    %v726 = vunpack.c.l.b16 %v658
    %v727 = vunpack.c.h.b16 %v658
    %v728 = vunpack.c.l.b16 %v659
    %v729 = vunpack.c.h.b16 %v659
    %v730 = vunpack.c.l.b16 %v660
    %v731 = vunpack.c.h.b16 %v660
    %v732 = vunpack.c.l.b16 %v661
    %v733 = vunpack.c.h.b16 %v661
    %v734 = vunpack.c.l.b16 %v662
    %v735 = vunpack.c.h.b16 %v662
    %v736 = vunpack.c.l.b16 %v663
    %v737 = vunpack.c.h.b16 %v663
    %v738 = vunpack.c.l.b16 %v664
    %v739 = vunpack.c.h.b16 %v664
    %v740 = vunpack.c.l.b16 %v665
    %v741 = vunpack.c.h.b16 %v665
    %v742 = vunpack.c.l.b16 %v666
    %v743 = vunpack.c.h.b16 %v666
    %v744 = vunpack.c.l.b16 %v667
    %v745 = vunpack.c.h.b16 %v667
    %v746 = vunpack.c.l.b16 %v668
    %v747 = vunpack.c.h.b16 %v668
    %v748 = vunpack.c.l.b16 %v669
    %v749 = vunpack.c.h.b16 %v669
    %v750 = vunpack.c.l.b16 %v670
    %v751 = vunpack.c.h.b16 %v670
    %v752 = vunpack.c.l.b16 %v671
    %v753 = vunpack.c.h.b16 %v671
    %v754 = vunpack.c.l.b16 %v672
    %v755 = vunpack.c.h.b16 %v672
    %v756 = vunpack.c.l.b16 %v673
    %v757 = vunpack.c.h.b16 %v673
    %v758 = vunpack.c.l.b16 %v674
    %v759 = vunpack.c.h.b16 %v674
    %v760 = vunpack.c.l.b16 %v675
    %v761 = vunpack.c.h.b16 %v675
    %v762 = vunpack.c.l.b16 %v676
    %v763 = vunpack.c.h.b16 %v676
    %v764 = vunpack.c.l.b16 %v677
    %v765 = vunpack.c.h.b16 %v677
    %v766 = vunpack.c.l.b16 %v678
    %v767 = vunpack.c.h.b16 %v678
    %v768 = vunpack.c.l.b16 %v679
    %v769 = vunpack.c.h.b16 %v679
    %v770 = vunpack.c.l.b16 %v680
    %v771 = vunpack.c.h.b16 %v680
    %v772 = vunpack.c.l.b16 %v681
    %v773 = vunpack.c.h.b16 %v681
    %v774 = vunpack.c.l.b16 %v682
    %v775 = vunpack.c.h.b16 %v682
    %v776 = vunpack.c.l.b16 %v683
    %v777 = vunpack.c.h.b16 %v683
    %v778 = vunpack.c.l.b16 %v684
    %v779 = vunpack.c.h.b16 %v684
    %v780 = vunpack.c.l.b16 %v685
    %v781 = vunpack.c.h.b16 %v685
    %v782 = vpack.c.b16 %v718, %v718
    %v783 = vpack.c.b16 %v719, %v719
    %v784 = vpack.c.b16 %v720, %v720
    %v785 = vpack.c.b16 %v721, %v721
    %v786 = vpack.c.b16 %v722, %v722
    %v787 = vpack.c.b16 %v723, %v723
    %v788 = vpack.c.b16 %v724, %v724
    %v789 = vpack.c.b16 %v725, %v725
    %v790 = vpack.c.b16 %v726, %v726
    %v791 = vpack.c.b16 %v727, %v727
    %v792 = vpack.c.b16 %v728, %v728
    %v793 = vpack.c.b16 %v729, %v729
    %v794 = vpack.c.b16 %v730, %v730
    %v795 = vpack.c.b16 %v731, %v731
    %v796 = vpack.c.b16 %v732, %v732
    %v797 = vpack.c.b16 %v733, %v733
    %v798 = vpack.c.b16 %v734, %v734
    %v799 = vpack.c.b16 %v735, %v735
    %v800 = vpack.c.b16 %v736, %v736
    %v801 = vpack.c.b16 %v737, %v737
    %v802 = vpack.c.b16 %v738, %v738
    %v803 = vpack.c.b16 %v739, %v739
    %v804 = vpack.c.b16 %v740, %v740
    %v805 = vpack.c.b16 %v741, %v741
    %v806 = vpack.c.b16 %v742, %v742
    %v807 = vpack.c.b16 %v743, %v743
    %v808 = vpack.c.b16 %v744, %v744
    %v809 = vpack.c.b16 %v745, %v745
    %v810 = vpack.c.b16 %v746, %v746
    %v811 = vpack.c.b16 %v747, %v747
    %v812 = vpack.c.b16 %v748, %v748
    %v813 = vpack.c.b16 %v749, %v749
    %v814 = vpack.c.b16 %v750, %v750
    %v815 = vpack.c.b16 %v751, %v751
    %v816 = vpack.c.b16 %v752, %v752
    %v817 = vpack.c.b16 %v753, %v753
    %v818 = vpack.c.b16 %v754, %v754
    %v819 = vpack.c.b16 %v755, %v755
    %v820 = vpack.c.b16 %v756, %v756
    %v821 = vpack.c.b16 %v757, %v757
    %v822 = vpack.c.b16 %v758, %v758
    %v823 = vpack.c.b16 %v759, %v759
    %v824 = vpack.c.b16 %v760, %v760
    %v825 = vpack.c.b16 %v761, %v761
    %v826 = vpack.c.b16 %v762, %v762
    %v827 = vpack.c.b16 %v763, %v763
    %v828 = vpack.c.b16 %v764, %v764
    %v829 = vpack.c.b16 %v765, %v765
    %v830 = vpack.c.b16 %v766, %v766
    %v831 = vpack.c.b16 %v767, %v767
    %v832 = vpack.c.b16 %v768, %v768
    %v833 = vpack.c.b16 %v769, %v769
    %v834 = vpack.c.b16 %v770, %v770
    %v835 = vpack.c.b16 %v771, %v771
    %v836 = vpack.c.b16 %v772, %v772
    %v837 = vpack.c.b16 %v773, %v773
    %v838 = vpack.c.b16 %v774, %v774
    %v839 = vpack.c.b16 %v775, %v775
    %v840 = vpack.c.b16 %v776, %v776
    %v841 = vpack.c.b16 %v777, %v777
    %v842 = vpack.c.b16 %v778, %v778
    %v843 = vpack.c.b16 %v779, %v779
    %v844 = vpack.c.b16 %v780, %v780
    %v845 = vpack.c.b16 %v781, %v781
    %910 = vst [vmem:[#allocation7] sm:$0xf] %v782
    %911 = vst [vmem:[#allocation7 + $0x4] sm:$0xf] %v783
    %912 = vst [vmem:[#allocation7 + $0x8] sm:$0xf] %v784
    %913 = vst [vmem:[#allocation7 + $0xc] sm:$0xf] %v785
    %914 = vst [vmem:[#allocation7 + $0x10] sm:$0xf] %v786
    %915 = vst [vmem:[#allocation7 + $0x14] sm:$0xf] %v787
    %916 = vst [vmem:[#allocation7 + $0x18] sm:$0xf] %v788
    %917 = vst [vmem:[#allocation7 + $0x1c] sm:$0xf] %v789
    %918 = vst [vmem:[#allocation7 + $0x20] sm:$0xf] %v790
    %919 = vst [vmem:[#allocation7 + $0x24] sm:$0xf] %v791
    %920 = vst [vmem:[#allocation7 + $0x28] sm:$0xf] %v792
    %921 = vst [vmem:[#allocation7 + $0x2c] sm:$0xf] %v793
    %922 = vst [vmem:[#allocation7 + $0x30] sm:$0xf] %v794
    %923 = vst [vmem:[#allocation7 + $0x34] sm:$0xf] %v795
    %924 = vst [vmem:[#allocation7 + $0x38] sm:$0xf] %v796
    %925 = vst [vmem:[#allocation7 + $0x3c] sm:$0xf] %v797
    %926 = vst [vmem:[#allocation7 + $0x40] sm:$0xf] %v798
    %927 = vst [vmem:[#allocation7 + $0x44] sm:$0xf] %v799
    %928 = vst [vmem:[#allocation7 + $0x48] sm:$0xf] %v800
    %929 = vst [vmem:[#allocation7 + $0x4c] sm:$0xf] %v801
    %930 = vst [vmem:[#allocation7 + $0x50] sm:$0xf] %v802
    %931 = vst [vmem:[#allocation7 + $0x54] sm:$0xf] %v803
    %932 = vst [vmem:[#allocation7 + $0x58] sm:$0xf] %v804
    %933 = vst [vmem:[#allocation7 + $0x5c] sm:$0xf] %v805
    %934 = vst [vmem:[#allocation7 + $0x60] sm:$0xf] %v806
    %935 = vst [vmem:[#allocation7 + $0x64] sm:$0xf] %v807
    %936 = vst [vmem:[#allocation7 + $0x68] sm:$0xf] %v808
    %937 = vst [vmem:[#allocation7 + $0x6c] sm:$0xf] %v809
    %938 = vst [vmem:[#allocation7 + $0x70] sm:$0xf] %v810
    %939 = vst [vmem:[#allocation7 + $0x74] sm:$0xf] %v811
    %940 = vst [vmem:[#allocation7 + $0x78] sm:$0xf] %v812
    %941 = vst [vmem:[#allocation7 + $0x7c] sm:$0xf] %v813
    %942 = vst [vmem:[#allocation7 + $0x80] sm:$0xf] %v814
    %943 = vst [vmem:[#allocation7 + $0x84] sm:$0xf] %v815
    %944 = vst [vmem:[#allocation7 + $0x88] sm:$0xf] %v816
    %945 = vst [vmem:[#allocation7 + $0x8c] sm:$0xf] %v817
    %946 = vst [vmem:[#allocation7 + $0x90] sm:$0xf] %v818
    %947 = vst [vmem:[#allocation7 + $0x94] sm:$0xf] %v819
    %948 = vst [vmem:[#allocation7 + $0x98] sm:$0xf] %v820
    %949 = vst [vmem:[#allocation7 + $0x9c] sm:$0xf] %v821
    %950 = vst [vmem:[#allocation7 + $0xa0] sm:$0xf] %v822
    %951 = vst [vmem:[#allocation7 + $0xa4] sm:$0xf] %v823
    %952 = vst [vmem:[#allocation7 + $0xa8] sm:$0xf] %v824
    %953 = vst [vmem:[#allocation7 + $0xac] sm:$0xf] %v825
    %954 = vst [vmem:[#allocation7 + $0xb0] sm:$0xf] %v826
    %955 = vst [vmem:[#allocation7 + $0xb4] sm:$0xf] %v827
    %956 = vst [vmem:[#allocation7 + $0xb8] sm:$0xf] %v828
    %957 = vst [vmem:[#allocation7 + $0xbc] sm:$0xf] %v829
    %958 = vst [vmem:[#allocation7 + $0xc0] sm:$0xf] %v830
    %959 = vst [vmem:[#allocation7 + $0xc4] sm:$0xf] %v831
    %960 = vst [vmem:[#allocation7 + $0xc8] sm:$0xf] %v832
    %961 = vst [vmem:[#allocation7 + $0xcc] sm:$0xf] %v833
    %962 = vst [vmem:[#allocation7 + $0xd0] sm:$0xf] %v834
    %963 = vst [vmem:[#allocation7 + $0xd4] sm:$0xf] %v835
    %964 = vst [vmem:[#allocation7 + $0xd8] sm:$0xf] %v836
    %965 = vst [vmem:[#allocation7 + $0xdc] sm:$0xf] %v837
    %966 = vst [vmem:[#allocation7 + $0xe0] sm:$0xf] %v838
    %967 = vst [vmem:[#allocation7 + $0xe4] sm:$0xf] %v839
    %968 = vst [vmem:[#allocation7 + $0xe8] sm:$0xf] %v840
    %969 = vst [vmem:[#allocation7 + $0xec] sm:$0xf] %v841
    %970 = vst [vmem:[#allocation7 + $0xf0] sm:$0xf] %v842
    %971 = vst [vmem:[#allocation7 + $0xf4] sm:$0xf] %v843
    %972 = vst [vmem:[#allocation7 + $0xf8] sm:$0xf] %v844
    %973 = vst [vmem:[#allocation7 + $0xfc] sm:$0xf] %v845
    %v974 = vadd.f32 %v400, %v403
    %v975 = vadd.f32 %v974, %v408
    %v976 = vadd.f32 %v975, %v411
    %v977 = vadd.f32 %v976, %v416
    %v978 = vadd.f32 %v977, %v419
    %v979 = vadd.f32 %v978, %v424
    %v980 = vadd.f32 %v979, %v427
    %v981 = vadd.f32 %v980, %v432
    %v982 = vadd.f32 %v981, %v435
    %v983 = vadd.f32 %v982, %v440
    %v984 = vadd.f32 %v983, %v443
    %v985 = vadd.f32 %v984, %v448
    %v986 = vadd.f32 %v985, %v451
    %v987 = vadd.f32 %v986, %v456
    %v988 = vadd.f32 %v987, %v459
    %v989 = vadd.f32 %v988, %v464
    %v990 = vadd.f32 %v989, %v467
    %v991 = vadd.f32 %v990, %v472
    %v992 = vadd.f32 %v991, %v475
    %v993 = vadd.f32 %v992, %v480
    %v994 = vadd.f32 %v993, %v483
    %v995 = vadd.f32 %v994, %v488
    %v996 = vadd.f32 %v995, %v491
    %v997 = vadd.f32 %v996, %v496
    %v998 = vadd.f32 %v997, %v499
    %v999 = vadd.f32 %v998, %v504
    %v1000 = vadd.f32 %v999, %v507
    %v1001 = vadd.f32 %v1000, %v512
    %v1002 = vadd.f32 %v1001, %v515
    %v1003 = vadd.f32 %v1002, %v520
    %v1004 = vadd.f32 %v1003, %v523
    %v1005 = vadd.f32 %v1004, %v528
    %v1006 = vadd.f32 %v1005, %v531
    %v1007 = vadd.f32 %v1006, %v536
    %v1008 = vadd.f32 %v1007, %v539
    %v1009 = vadd.f32 %v1008, %v544
    %v1010 = vadd.f32 %v1009, %v547
    %v1011 = vadd.f32 %v1010, %v552
    %v1012 = vadd.f32 %v1011, %v555
    %v1013 = vadd.f32 %v1012, %v560
    %v1014 = vadd.f32 %v1013, %v563
    %v1015 = vadd.f32 %v1014, %v568
    %v1016 = vadd.f32 %v1015, %v571
    %v1017 = vadd.f32 %v1016, %v576
    %v1018 = vadd.f32 %v1017, %v579
    %v1019 = vadd.f32 %v1018, %v584
    %v1020 = vadd.f32 %v1019, %v587
    %v1021 = vadd.f32 %v1020, %v592
    %v1022 = vadd.f32 %v1021, %v595
    %v1023 = vadd.f32 %v1022, %v600
    %v1024 = vadd.f32 %v1023, %v603
    %v1025 = vadd.f32 %v1024, %v608
    %v1026 = vadd.f32 %v1025, %v611
    %v1027 = vadd.f32 %v1026, %v616
    %v1028 = vadd.f32 %v1027, %v619
    %v1029 = vadd.f32 %v1028, %v624
    %v1030 = vadd.f32 %v1029, %v627
    %v1031 = vadd.f32 %v1030, %v632
    %v1032 = vadd.f32 %v1031, %v635
    %v1033 = vadd.f32 %v1032, %v640
    %v1034 = vadd.f32 %v1033, %v643
    %v1035 = vadd.f32 %v1034, %v648
    %v1036 = vadd.f32 %v1035, %v651
    %v1037 = vrot.slane %v1036, 4
    %v1038 = vadd.f32 %v1036, %v1037
    %v1039 = vrot.slane %v1038, 2
    %v1040 = vadd.f32 %v1038, %v1039
    %v1041 = vrot.slane %v1040, 1
    %v1042 = vadd.f32 %v1040, %v1041
    %v1043 = vmul.f32 %v400, %v400
    %v1044 = vmul.f32 %v403, %v403
    %v1045 = vmul.f32 %v408, %v408
    %v1046 = vmul.f32 %v411, %v411
    %v1047 = vmul.f32 %v416, %v416
    %v1048 = vmul.f32 %v419, %v419
    %v1049 = vmul.f32 %v424, %v424
    %v1050 = vmul.f32 %v427, %v427
    %v1051 = vmul.f32 %v432, %v432
    %v1052 = vmul.f32 %v435, %v435
    %v1053 = vmul.f32 %v440, %v440
    %v1054 = vmul.f32 %v443, %v443
    %v1055 = vmul.f32 %v448, %v448
    %v1056 = vmul.f32 %v451, %v451
    %v1057 = vmul.f32 %v456, %v456
    %v1058 = vmul.f32 %v459, %v459
    %v1059 = vmul.f32 %v464, %v464
    %v1060 = vmul.f32 %v467, %v467
    %v1061 = vmul.f32 %v472, %v472
    %v1062 = vmul.f32 %v475, %v475
    %v1063 = vmul.f32 %v480, %v480
    %v1064 = vmul.f32 %v483, %v483
    %v1065 = vmul.f32 %v488, %v488
    %v1066 = vmul.f32 %v491, %v491
    %v1067 = vmul.f32 %v496, %v496
    %v1068 = vmul.f32 %v499, %v499
    %v1069 = vmul.f32 %v504, %v504
    %v1070 = vmul.f32 %v507, %v507
    %v1071 = vmul.f32 %v512, %v512
    %v1072 = vmul.f32 %v515, %v515
    %v1073 = vmul.f32 %v520, %v520
    %v1074 = vmul.f32 %v523, %v523
    %v1075 = vmul.f32 %v528, %v528
    %v1076 = vmul.f32 %v531, %v531
    %v1077 = vmul.f32 %v536, %v536
    %v1078 = vmul.f32 %v539, %v539
    %v1079 = vmul.f32 %v544, %v544
    %v1080 = vmul.f32 %v547, %v547
    %v1081 = vmul.f32 %v552, %v552
    %v1082 = vmul.f32 %v555, %v555
    %v1083 = vmul.f32 %v560, %v560
    %v1084 = vmul.f32 %v563, %v563
    %v1085 = vmul.f32 %v568, %v568
    %v1086 = vmul.f32 %v571, %v571
    %v1087 = vmul.f32 %v576, %v576
    %v1088 = vmul.f32 %v579, %v579
    %v1089 = vmul.f32 %v584, %v584
    %v1090 = vmul.f32 %v587, %v587
    %v1091 = vmul.f32 %v592, %v592
    %v1092 = vmul.f32 %v595, %v595
    %v1093 = vmul.f32 %v600, %v600
    %v1094 = vmul.f32 %v603, %v603
    %v1095 = vmul.f32 %v608, %v608
    %v1096 = vmul.f32 %v611, %v611
    %v1097 = vmul.f32 %v616, %v616
    %v1098 = vmul.f32 %v619, %v619
    %v1099 = vmul.f32 %v624, %v624
    %v1100 = vmul.f32 %v627, %v627
    %v1101 = vmul.f32 %v632, %v632
    %v1102 = vmul.f32 %v635, %v635
    %v1103 = vmul.f32 %v640, %v640
    %v1104 = vmul.f32 %v643, %v643
    %v1105 = vmul.f32 %v648, %v648
    %v1106 = vmul.f32 %v651, %v651
    %v1107 = vadd.f32 %v1043, %v1044
    %v1108 = vadd.f32 %v1107, %v1045
    %v1109 = vadd.f32 %v1108, %v1046
    %v1110 = vadd.f32 %v1109, %v1047
    %v1111 = vadd.f32 %v1110, %v1048
    %v1112 = vadd.f32 %v1111, %v1049
    %v1113 = vadd.f32 %v1112, %v1050
    %v1114 = vadd.f32 %v1113, %v1051
    %v1115 = vadd.f32 %v1114, %v1052
    %v1116 = vadd.f32 %v1115, %v1053
    %v1117 = vadd.f32 %v1116, %v1054
    %v1118 = vadd.f32 %v1117, %v1055
    %v1119 = vadd.f32 %v1118, %v1056
    %v1120 = vadd.f32 %v1119, %v1057
    %v1121 = vadd.f32 %v1120, %v1058
    %v1122 = vadd.f32 %v1121, %v1059
    %v1123 = vadd.f32 %v1122, %v1060
    %v1124 = vadd.f32 %v1123, %v1061
    %v1125 = vadd.f32 %v1124, %v1062
    %v1126 = vadd.f32 %v1125, %v1063
    %v1127 = vadd.f32 %v1126, %v1064
    %v1128 = vadd.f32 %v1127, %v1065
    %v1129 = vadd.f32 %v1128, %v1066
    %v1130 = vadd.f32 %v1129, %v1067
    %v1131 = vadd.f32 %v1130, %v1068
    %v1132 = vadd.f32 %v1131, %v1069
    %v1133 = vadd.f32 %v1132, %v1070
    %v1134 = vadd.f32 %v1133, %v1071
    %v1135 = vadd.f32 %v1134, %v1072
    %v1136 = vadd.f32 %v1135, %v1073
    %v1137 = vadd.f32 %v1136, %v1074
    %v1138 = vadd.f32 %v1137, %v1075
    %v1139 = vadd.f32 %v1138, %v1076
    %v1140 = vadd.f32 %v1139, %v1077
    %v1141 = vadd.f32 %v1140, %v1078
    %v1142 = vadd.f32 %v1141, %v1079
    %v1143 = vadd.f32 %v1142, %v1080
    %v1144 = vadd.f32 %v1143, %v1081
    %v1145 = vadd.f32 %v1144, %v1082
    %v1146 = vadd.f32 %v1145, %v1083
    %v1147 = vadd.f32 %v1146, %v1084
    %v1148 = vadd.f32 %v1147, %v1085
    %v1149 = vadd.f32 %v1148, %v1086
    %v1150 = vadd.f32 %v1149, %v1087
    %v1151 = vadd.f32 %v1150, %v1088
    %v1152 = vadd.f32 %v1151, %v1089
    %v1153 = vadd.f32 %v1152, %v1090
    %v1154 = vadd.f32 %v1153, %v1091
    %v1155 = vadd.f32 %v1154, %v1092
    %v1156 = vadd.f32 %v1155, %v1093
    %v1157 = vadd.f32 %v1156, %v1094
    %v1158 = vadd.f32 %v1157, %v1095
    %v1159 = vadd.f32 %v1158, %v1096
    %v1160 = vadd.f32 %v1159, %v1097
    %v1161 = vadd.f32 %v1160, %v1098
    %v1162 = vadd.f32 %v1161, %v1099
    %v1163 = vadd.f32 %v1162, %v1100
    %v1164 = vadd.f32 %v1163, %v1101
    %v1165 = vadd.f32 %v1164, %v1102
    %v1166 = vadd.f32 %v1165, %v1103
    %v1167 = vadd.f32 %v1166, %v1104
    %v1168 = vadd.f32 %v1167, %v1105
    %v1169 = vadd.f32 %v1168, %v1106
    %v1170 = vrot.slane %v1169, 4
    %v1171 = vadd.f32 %v1169, %v1170
    %v1172 = vrot.slane %v1171, 2
    %v1173 = vadd.f32 %v1171, %v1172
    %v1174 = vrot.slane %v1173, 1
    %v1175 = vadd.f32 %v1173, %v1174
    %1176 = vst [vmem:[#allocation8] sm:$0xff] %v1042
    %1177 = vst [vmem:[#allocation10] sm:$0xff] %v1175
    // Predicated region
    $region18: #{tpu_custom_call.1} parent=1 // pred_check
      _
    $region19: #{tpu_custom_call.1} parent=1 // pred_check_branch
      %1179 = sbr.rel (0) target = $region21
    $region20: #{tpu_custom_call.1} parent=1 // pred_region
      %s1181 = ssub.s32 4096, 4096
      %1182 = vsyncadd [#allocation4], %s1181
      %s1183 = sshll.u32 [#allocation7], 4
      %s1184 = int_to_ptr.vmem [resolvable:$true] %s1183
      %1189 = dma.vmem_to_hbm [thread:$0]  %s1184, 4096, %s2, [#allocation4], 64, 64, 4
    $region21: #{tpu_custom_call.1} parent=1 // pred_fallthru
      _
    // Predicated region
    $region22: #{tpu_custom_call.1} parent=1 // pred_check
      _
    $region23: #{tpu_custom_call.1} parent=1 // pred_check_branch
      %1191 = sbr.rel (0) target = $region25
    $region24: #{tpu_custom_call.1} parent=1 // pred_region
      %s1193 = ssub.s32 128, 128
      %1194 = vsyncadd [#allocation9], %s1193
      %s1196 = sshll.u32 [#allocation8], 4
      %s1197 = int_to_ptr.vmem [resolvable:$true] %s1196
      %1199 = dma.vmem_to_hbm [thread:$0]  %s1197, 128, %s3, [#allocation9]
    $region25: #{tpu_custom_call.1} parent=1 // pred_fallthru
      _
    // Predicated region
    $region26: #{tpu_custom_call.1} parent=1 // pred_check
      _
    $region27: #{tpu_custom_call.1} parent=1 // pred_check_branch
      %1201 = sbr.rel (0) target = $region29
    $region28: #{tpu_custom_call.1} parent=1 // pred_region
      %s1203 = ssub.s32 128, 128
      %1204 = vsyncadd [#allocation9], %s1203
      %s1206 = sshll.u32 [#allocation10], 4
      %s1207 = int_to_ptr.vmem [resolvable:$true] %s1206
      %1209 = dma.vmem_to_hbm [thread:$0]  %s1207, 128, %s4, [#allocation9]
    $region29: #{tpu_custom_call.1} parent=1 // pred_fallthru
      _
    // Predicated region
    $region30: #{tpu_custom_call.1} parent=1 // pred_check
      _
    $region31: #{tpu_custom_call.1} parent=1 // pred_check_branch
      %1211 = sbr.rel (0) target = $region33
    $region32: #{tpu_custom_call.1} parent=1 // pred_region
      %1212 = dma.done [#allocation4], 4096
    $region33: #{tpu_custom_call.1} parent=1 // pred_fallthru
      _
    // Predicated region
    $region34: #{tpu_custom_call.1} parent=1 // pred_check
      _
    $region35: #{tpu_custom_call.1} parent=1 // pred_check_branch
      %1214 = sbr.rel (0) target = $region37
    $region36: #{tpu_custom_call.1} parent=1 // pred_region
      %1215 = dma.done [#allocation9], 128
    $region37: #{tpu_custom_call.1} parent=1 // pred_fallthru
      _
    // Predicated region
    $region38: #{tpu_custom_call.1} parent=1 // pred_check
      _
    $region39: #{tpu_custom_call.1} parent=1 // pred_check_branch
      %1217 = sbr.rel (0) target = $region41
    $region40: #{tpu_custom_call.1} parent=1 // pred_region
      %1218 = dma.done [#allocation9], 128
    $region41: #{tpu_custom_call.1} parent=1 // pred_fallthru
      _
    %1219 = vsyncpa [#allocation3], 1
    %1220 = vsyncpa [#allocation6], 1
    %1221 = vsyncpa [#allocation4], 1
    %1222 = vsyncpa [#allocation9], 1

</llo_original>
